<compile_context>
chip_gen: v5e
topology: v5e:2x2
jax: 0.10.0
libtpu: 0.0.40
codegen_flags: <defaults>
</compile_context>

<pallas_src>
import math

import jax
import jax.numpy as jnp
from jax.experimental import pallas as pl
from jax.experimental.pallas import tpu as pltpu


def _perturb_add_kernel(x_ref, p_ref, o_ref):
    # out = batched_data + perturb, computed in the promoted (output) dtype.
    # The casts run on the VPU underneath the tile DMAs, so fusing them here
    # saves a full HBM read+write of perturb vs. a wrapper-side astype().
    o_ref[...] = x_ref[...].astype(o_ref.dtype) + p_ref[...].astype(o_ref.dtype)


_LANE = 128
_SMALL_BYTES = 1 << 20  # below this a pallas_call is pure overhead


def _sublane_multiple(dtype):
    # Packing multiple of the second-to-last (sublane) block dim:
    # f32 -> 8, bf16/f16 -> 16, int8/fp8 -> 32.
    return {4: 8, 2: 16, 1: 32}.get(jnp.dtype(dtype).itemsize, 8)


def _chip_budgets():
    """(target block bytes per input, vmem_limit_bytes, two_tensorcores)."""
    try:
        info = pltpu.get_tpu_info()
        vmem = getattr(info, "vmem_capacity_bytes", 64 << 20)
    except Exception:  # non-TPU backend / interpret mode: be conservative
        vmem = 64 << 20
    if vmem <= (96 << 20):
        # v7x-like: 64 MiB VMEM per TensorCore, 2 TCs per chip.
        # working set = 3 arrays x 2 buffers x 6 MiB = 36 MiB < 48 MiB limit.
        return (6 << 20), (48 << 20), True
    # v5e / v6e: 128 MiB VMEM, single TensorCore -> bigger blocks, fewer steps.
    return (12 << 20), (100 << 20), False


def _cdiv(a, b):
    return -(-a // b)


def _pallas_add_2d(x2, p2, out_dtype):
    """Elementwise add of two 2D arrays; block last dim == full array last dim."""
    rows, cols = x2.shape
    target_block_bytes, vmem_limit, two_tc = _chip_budgets()

    itemsizes = [
        jnp.dtype(x2.dtype).itemsize,
        jnp.dtype(p2.dtype).itemsize,
        jnp.dtype(out_dtype).itemsize,
    ]
    sub = max(
        _sublane_multiple(x2.dtype),
        _sublane_multiple(p2.dtype),
        _sublane_multiple(out_dtype),
    )

    # If even the minimal legal block (sub rows x full last dim, double
    # buffered, 3 arrays) would blow the VMEM budget, let XLA handle it.
    min_working_set = 2 * sub * cols * sum(itemsizes)
    if min_working_set > int(vmem_limit * 0.8):
        return x2.astype(out_dtype) + p2.astype(out_dtype)

    per_row_bytes = cols * max(itemsizes)
    target_rows = max(sub, target_block_bytes // per_row_bytes)
    n_blocks = max(1, _cdiv(rows, target_rows))
    if two_tc and rows >= 2 * sub:
        # Never collapse to grid=(1,) (or an odd small grid) on a 2-TC chip:
        # this op is purely bandwidth-bound, so an idle core is ~2x wall time.
        n_blocks = max(2, n_blocks)
        if n_blocks % 2:
            n_blocks += 1
    n_blocks = min(n_blocks, max(1, rows // sub))

    block_rows = _cdiv(_cdiv(rows, n_blocks), sub) * sub
    block_rows = min(block_rows, rows)  # full-extent block is always legal

    grid = (_cdiv(rows, block_rows),)
    blk = pl.BlockSpec((block_rows, cols), lambda i: (i, 0))

    return pl.pallas_call(
        _perturb_add_kernel,
        out_shape=jax.ShapeDtypeStruct((rows, cols), out_dtype),
        grid=grid,
        in_specs=[blk, blk],
        out_specs=blk,
        compiler_params=pltpu.CompilerParams(
            dimension_semantics=("parallel",),
            vmem_limit_bytes=vmem_limit,
        ),
    )(x2, p2)


def base_model_forward(batched_data, perturb=None, *, force_pallas=False):
    """Pallas equivalent of BaseModel.forward's only defined semantics.

    batched_data: float array of any shape (e.g. [B, N, H])
    perturb:      optional array of the same shape, added elementwise
    force_pallas: test hook to bypass the small-input XLA fast path
    """
    if perturb is None:
        # Identity pass-through: a copy kernel would burn HBM bandwidth for
        # zero compute.
        return batched_data

    assert batched_data.shape == perturb.shape, "perturb must match batched_data"
    orig_shape = batched_data.shape
    # Match PyTorch type promotion for `batched_data + perturb`
    # (e.g. bf16 data + f32 perturb -> f32 result, add computed in f32).
    out_dtype = jnp.result_type(batched_data.dtype, perturb.dtype)

    total = math.prod(orig_shape)
    if total == 0:
        return batched_data.astype(out_dtype) + perturb.astype(out_dtype)

    nbytes = total * jnp.dtype(out_dtype).itemsize
    if nbytes < _SMALL_BYTES and not force_pallas:
        # Small-input fast path: launch + plumbing cost dwarfs the traffic.
        return batched_data.astype(out_dtype) + perturb.astype(out_dtype)

    if total % _LANE == 0:
        # Lane-dense fold: widest lane width that divides the flat length.
        lane = _LANE
        for cand in (2048, 1024, 512, 256):
            if total % cand == 0:
                lane = cand
                break
        rows, cols = total // lane, lane
    elif batched_data.ndim >= 2:
        # Irregular flat length: keep the natural last dim as the full-extent
        # block lane dim and let Pallas mask ragged edges.  No jnp.pad / slice
        # passes -> no extra HBM round trips.
        cols = orig_shape[-1]
        rows = total // cols
    else:
        # 1-D, non-128-multiple: no clean 2D fold; let XLA handle it.
        return batched_data.astype(out_dtype) + perturb.astype(out_dtype)

    x2 = batched_data.reshape(rows, cols)   # contiguous row-major: free
    p2 = perturb.reshape(rows, cols)
    out2 = _pallas_add_2d(x2, p2, out_dtype)
    return out2.reshape(orig_shape)


if __name__ == "__main__":
    key = jax.random.PRNGKey(0)
    k1, k2 = jax.random.split(key)

    # 1) Identity path (perturb=None): returns the input, no kernel launched.
    B, N, H = 2, 16, 128
    x = jax.random.normal(k1, (B, N, H), dtype=jnp.float32)
    out0 = jax.block_until_ready(base_model_forward(x))
    assert jnp.array_equal(out0, x)

    # 2) Small-shape perturb path forced through the Pallas kernel.
    p = 0.01 * jax.random.normal(k2, (B, N, H), dtype=jnp.float32)
    out1 = jax.block_until_ready(base_model_forward(x, p, force_pallas=True))
    assert jnp.allclose(out1, x + p, atol=1e-6)

    # 3) Default small-input fast path (plain XLA fused add).
    out1b = jax.block_until_ready(base_model_forward(x, p))
    assert jnp.allclose(out1b, x + p, atol=1e-6)

    # 4) Mixed dtypes, non-128-multiple hidden dim: bf16 data + f32 perturb
    #    -> f32 result (PyTorch-style promotion), cast fused inside the kernel.
    B2, N2, H2 = 2, 512, 192
    x_bf = jax.random.normal(k1, (B2, N2, H2), dtype=jnp.bfloat16)
    p_f32 = 0.01 * jax.random.normal(k2, (B2, N2, H2), dtype=jnp.float32)
    out_bf = jax.block_until_ready(base_model_forward(x_bf, p_f32, force_pallas=True))
    assert out_bf.dtype == jnp.float32
    assert jnp.allclose(out_bf, x_bf.astype(jnp.float32) + p_f32, atol=1e-2)

    # 5) Irregular flat length (not a multiple of 128): full-extent last-dim
    #    block, no pad/slice HBM passes.
    B3, N3, H3 = 3, 5, 7
    x_odd = jax.random.normal(k1, (B3, N3, H3), dtype=jnp.float32)
    p_odd = 0.01 * jax.random.normal(k2, (B3, N3, H3), dtype=jnp.float32)
    out_odd = jax.block_until_ready(base_model_forward(x_odd, p_odd, force_pallas=True))
    assert jnp.allclose(out_odd, x_odd + p_odd, atol=1e-6)

    # 6) Moderate size exercising the default Pallas path (2 MiB per input,
    #    above the fast-path threshold; multi-step grid on 2-TC chips).
    B4, N4, H4 = 4, 512, 256
    x_big = jax.random.normal(k1, (B4, N4, H4), dtype=jnp.float32)
    p_big = 0.01 * jax.random.normal(k2, (B4, N4, H4), dtype=jnp.float32)
    out_big = jax.block_until_ready(base_model_forward(x_big, p_big))
    assert jnp.allclose(out_big, x_big + p_big, atol=1e-6)

    print("KERNEL_OK")
</pallas_src>

<mosaic_0001>
module attributes {stable_mosaic.version = 11 : i64} {
  func.func @_perturb_add_kernel(%arg0: i32, %arg1: memref<2x2048xf32, #tpu.memory_space<vmem>>, %arg2: memref<2x2048xf32, #tpu.memory_space<vmem>>, %arg3: memref<2x2048xf32, #tpu.memory_space<vmem>>) attributes {dimension_semantics = [#tpu.dimension_semantics<parallel>], iteration_bounds = array<i64: 1>, scalar_prefetch = 0 : i64, scratch_operands = 0 : i64, tpu.core_type = #tpu.core_type<tc>, window_params = [{transform_indices = @transform_0, window_bounds = array<i64: 2, 2048>}, {transform_indices = @transform_1, window_bounds = array<i64: 2, 2048>}, {transform_indices = @transform_2, window_bounds = array<i64: 2, 2048>}]} {
    %c0 = arith.constant 0 : index
    %c0_0 = arith.constant 0 : index
    %0 = vector.load %arg1[%c0, %c0_0] : memref<2x2048xf32, #tpu.memory_space<vmem>>, vector<2x2048xf32>
    %c0_1 = arith.constant 0 : index
    %c0_2 = arith.constant 0 : index
    %1 = vector.load %arg2[%c0_1, %c0_2] : memref<2x2048xf32, #tpu.memory_space<vmem>>, vector<2x2048xf32>
    %2 = arith.addf %0, %1 : vector<2x2048xf32>
    %c0_3 = arith.constant 0 : index
    %c0_4 = arith.constant 0 : index
    %3 = vector.load %arg3[%c0_3, %c0_4] : memref<2x2048xf32, #tpu.memory_space<vmem>>, vector<2x2048xf32>
    tpu.vector_store %arg3[%c0_3, %c0_4], %2 {strides = array<i32>} : memref<2x2048xf32, #tpu.memory_space<vmem>>, vector<2x2048xf32>,
    return
  }
  func.func @transform_0(%arg0: i32) -> (i32, i32) {
    %c0_i32 = arith.constant 0 : i32
    %c0_i32_0 = arith.constant 0 : i32
    return %arg0, %c0_i32 : i32, i32
  }
  func.func @transform_1(%arg0: i32) -> (i32, i32) {
    %c0_i32 = arith.constant 0 : i32
    %c0_i32_0 = arith.constant 0 : i32
    return %arg0, %c0_i32 : i32, i32
  }
  func.func @transform_2(%arg0: i32) -> (i32, i32) {
    %c0_i32 = arith.constant 0 : i32
    %c0_i32_0 = arith.constant 0 : i32
    return %arg0, %c0_i32 : i32, i32
  }
}

</mosaic_0001>

<llo_original>
// kernel: tpu_custom_call.1
$region0: #{tpu_custom_call.1}
  #allocation0 [shape = 'u32[]', space=smem, size = 0x4, offset = 0x4, fixed_abs, tag = 'smem constant byte address 0x4 - core index']
  #allocation1 [shape = 'u32[72,128]{1,0:T(1,128)}', space=vmem, size = 0x9000, scoped, tag = 'internal scratch']
  %s0 = inlined_call_operand.hbm [shape: f32[2,2048], index: 0, kind: input, shape index: {}]
  %s1 = inlined_call_operand.hbm [shape: f32[2,2048], index: 1, kind: input, shape index: {}]
  %s2 = inlined_call_operand.hbm [shape: f32[2,2048], index: 2, kind: output, shape index: {}]
  %s3 = sld [smem:[#allocation0]]
  $region26: #{tpu_custom_call.1} parent=0
    _
  %s5 = ssub.s32 1, %s3
  %s6 = scalar_select 0, %s5, %s3
  $region1: #{tpu_custom_call.1} parent=0
    #allocation2 [shape = 'u8[16384]{0}', space=vmem, size = 0x4000, scoped, tag = 'input window, operand 0, single buffered']
    #allocation3 [shape = 's32[1]{0}', space=sflag, size = 0x4, scoped, tag = 'scoped memory for tpu_custom_call.1']
    #allocation4 [shape = 's32[1]{0}', space=sflag, size = 0x4, scoped, tag = 'scoped memory for tpu_custom_call.1']
    #allocation5 [shape = 'u8[16384]{0}', space=vmem, size = 0x4000, scoped, tag = 'input window, operand 1, single buffered']
    #allocation6 [shape = 's32[1]{0}', space=sflag, size = 0x4, scoped, tag = 'scoped memory for tpu_custom_call.1']
    #allocation7 [shape = 'u8[16384]{0}', space=vmem, size = 0x4000, scoped, tag = 'output window, operand 0, single buffered']
    %7 = vsyncpa [#allocation3], 0
    %8 = vsyncpa [#allocation6], 0
    %9 = vsyncpa [#allocation4], 0
    // Predicated region
    $region2: #{tpu_custom_call.1} parent=1 // pred_check
      _
    $region3: #{tpu_custom_call.1} parent=1 // pred_check_branch
      %11 = sbr.rel (0) target = $region5
    $region4: #{tpu_custom_call.1} parent=1 // pred_region
      %13 = vsyncadd [#allocation3], 0
      %s15 = sshll.u32 %s0, 4
      %s16 = int_to_ptr.hbm [resolvable:$true] %s15
      %s17 = sshll.u32 [#allocation2], 4
      %s18 = int_to_ptr.vmem [resolvable:$true] %s17
      %20 = dma.hbm_to_vmem [thread:$0]  %s16, 512, %s18, [#allocation3]
    $region5: #{tpu_custom_call.1} parent=1 // pred_fallthru
      _
    // Predicated region
    $region6: #{tpu_custom_call.1} parent=1 // pred_check
      _
    $region7: #{tpu_custom_call.1} parent=1 // pred_check_branch
      %22 = sbr.rel (0) target = $region9
    $region8: #{tpu_custom_call.1} parent=1 // pred_region
      %24 = vsyncadd [#allocation6], 0
      %s26 = sshll.u32 %s1, 4
      %s27 = int_to_ptr.hbm [resolvable:$true] %s26
      %s28 = sshll.u32 [#allocation5], 4
      %s29 = int_to_ptr.vmem [resolvable:$true] %s28
      %31 = dma.hbm_to_vmem [thread:$0]  %s27, 512, %s29, [#allocation6]
    $region9: #{tpu_custom_call.1} parent=1 // pred_fallthru
      _
    // Predicated region
    $region10: #{tpu_custom_call.1} parent=1 // pred_check
      _
    $region11: #{tpu_custom_call.1} parent=1 // pred_check_branch
      %33 = sbr.rel (0) target = $region13
    $region12: #{tpu_custom_call.1} parent=1 // pred_region
      %35 = dma.done [#allocation3], 512
    $region13: #{tpu_custom_call.1} parent=1 // pred_fallthru
      _
    // Predicated region
    $region14: #{tpu_custom_call.1} parent=1 // pred_check
      _
    $region15: #{tpu_custom_call.1} parent=1 // pred_check_branch
      %37 = sbr.rel (0) target = $region17
    $region16: #{tpu_custom_call.1} parent=1 // pred_region
      %39 = dma.done [#allocation6], 512
    $region17: #{tpu_custom_call.1} parent=1 // pred_fallthru
      _
    %v40 = vld [vmem:[#allocation2] sm:$0xff]
    %v41 = vld [vmem:[#allocation2 + $0x8] sm:$0xff]
    %v42 = vld [vmem:[#allocation2 + $0x10] sm:$0xff]
    %v43 = vld [vmem:[#allocation2 + $0x18] sm:$0xff]
    %v44 = vld [vmem:[#allocation5] sm:$0xff]
    %v45 = vld [vmem:[#allocation5 + $0x8] sm:$0xff]
    %v46 = vld [vmem:[#allocation5 + $0x10] sm:$0xff]
    %v47 = vld [vmem:[#allocation5 + $0x18] sm:$0xff]
    %v48 = vadd.f32 %v40, %v44
    %v49 = vadd.f32 %v41, %v45
    %v50 = vadd.f32 %v42, %v46
    %v51 = vadd.f32 %v43, %v47
    %52 = vst [vmem:[#allocation7] sm:$0xff] %v48
    %53 = vst [vmem:[#allocation7 + $0x8] sm:$0xff] %v49
    %54 = vst [vmem:[#allocation7 + $0x10] sm:$0xff] %v50
    %55 = vst [vmem:[#allocation7 + $0x18] sm:$0xff] %v51
    // Predicated region
    $region18: #{tpu_custom_call.1} parent=1 // pred_check
      _
    $region19: #{tpu_custom_call.1} parent=1 // pred_check_branch
      %57 = sbr.rel (0) target = $region21
    $region20: #{tpu_custom_call.1} parent=1 // pred_region
      %59 = vsyncadd [#allocation4], 0
      %s61 = sshll.u32 [#allocation7], 4
      %s62 = int_to_ptr.vmem [resolvable:$true] %s61
      %s63 = sshll.u32 %s2, 4
      %s64 = int_to_ptr.hbm [resolvable:$true] %s63
      %66 = dma.vmem_to_hbm [thread:$0]  %s62, 512, %s64, [#allocation4]
    $region21: #{tpu_custom_call.1} parent=1 // pred_fallthru
      _
    // Predicated region
    $region22: #{tpu_custom_call.1} parent=1 // pred_check
      _
    $region23: #{tpu_custom_call.1} parent=1 // pred_check_branch
      %68 = sbr.rel (0) target = $region25
    $region24: #{tpu_custom_call.1} parent=1 // pred_region
      %70 = dma.done [#allocation4], 512
    $region25: #{tpu_custom_call.1} parent=1 // pred_fallthru
      _
    %71 = vsyncpa [#allocation3], 1
    %72 = vsyncpa [#allocation6], 1
    %73 = vsyncpa [#allocation4], 1

</llo_original>
